<compile_context>
chip_gen: v5e
topology: v5e:2x2
jax: 0.10.0
libtpu: 0.0.40
codegen_flags: <defaults>
</compile_context>

<pallas_src>
import functools
import math

import jax
import jax.numpy as jnp
from jax.experimental import pallas as pl
from jax.experimental.pallas import tpu as pltpu

BN_EPS = 1e-3
LAST_CHANNEL = 1280


# ----------------------------------------------------------------------------- VMEM budgets

def _vmem_budgets():
    """Per-generation scoped-VMEM limit and live-tile byte budget."""
    try:
        info = pltpu.get_tpu_info()
        cap = getattr(info, "vmem_capacity_bytes", None)
    except Exception:
        cap = None
    if cap is not None and cap >= 100 * 1024 * 1024:    # v5e / v6e: 128 MiB physical VMEM
        return 96 * 1024 * 1024, 32 * 1024 * 1024
    if cap is not None:                                  # v7x: 64 MiB physical VMEM per TC
        return 40 * 1024 * 1024, 12 * 1024 * 1024
    return 32 * 1024 * 1024, 10 * 1024 * 1024            # unknown backend: conservative


_VMEM_LIMIT, _TILE_BUDGET = _vmem_budgets()


# torchvision EfficientNetV2-L stage configuration.
# NOTE: the PyTorch module replaces the stem with a 24-channel conv although stock v2_l stage-1
# expects 32 input channels (the reference module is internally inconsistent); we adapt stage-1
# input channels to 24 to match the replaced stem.
#              (block , expand, k, stride, in_c, out_c, layers)
EFFNET_V2_L_STAGES = [
    ("fused", 1, 3, 1, 24, 32, 4),
    ("fused", 4, 3, 2, 32, 64, 7),
    ("fused", 4, 3, 2, 64, 96, 7),
    ("mb",    4, 3, 2, 96, 192, 10),
    ("mb",    6, 3, 1, 192, 224, 19),
    ("mb",    6, 3, 2, 224, 384, 25),
    ("mb",    6, 3, 1, 384, 640, 7),
]


# ----------------------------------------------------------------------------- helpers

def _compiler_params(*sem):
    return pltpu.CompilerParams(dimension_semantics=tuple(sem),
                                vmem_limit_bytes=_VMEM_LIMIT)


def _pick_rows(m_total, per_row_bytes, fixed_bytes=0, cap=2048):
    """Row-tile size: 128-aligned when large (MXU/lane alignment), 8-aligned minimum."""
    avail = max(_TILE_BUDGET - fixed_bytes, 2 * 1024 * 1024)
    t = int(avail // max(int(per_row_bytes), 1))
    t = max(t, 8)
    t = min(t, cap)
    if t >= m_total:
        return m_total
    if t >= 128:
        t = (t // 128) * 128
    else:
        t = (t // 8) * 8
    return t


def _act(x, act):
    if act == "silu":
        return x * jax.nn.sigmoid(x)
    if act == "relu":
        return jnp.maximum(x, 0.0)
    return x


# ----------------------------------------------------------------------------- Pallas kernels

def _matmul_bias_kernel(*refs, act, has_res):
    # x:(tm,K) bf16 @ w:(K,N) bf16 -> f32 acc; fused bias + activation (+ residual); store bf16.
    if has_res:
        x_ref, w_ref, b_ref, r_ref, o_ref = refs
    else:
        x_ref, w_ref, b_ref, o_ref = refs
        r_ref = None
    acc = jnp.dot(x_ref[...], w_ref[...], preferred_element_type=jnp.float32)
    acc = _act(acc + b_ref[...], act)
    if r_ref is not None:
        acc = acc + r_ref[...].astype(jnp.float32)
    o_ref[...] = acc.astype(o_ref.dtype)


def _conv3x3_s1_kernel(*refs, act, has_res):
    # Stride-1 3x3 conv, one padded image per grid step.  For each output row, accumulate
    # 9 shifted (W, Cin) @ (Cin, Cout) matmuls in f32; fused bias + activation (+ residual).
    if has_res:
        x_ref, w_ref, b_ref, r_ref, o_ref = refs
    else:
        x_ref, w_ref, b_ref, o_ref = refs
        r_ref = None
    H, W, cout = o_ref.shape

    def row(h, carry):
        acc = jnp.zeros((W, cout), jnp.float32)
        for di in range(3):
            for dj in range(3):
                xs = x_ref[h + di, pl.ds(dj, W), :]                       # (W, Cin) bf16
                acc = acc + jnp.dot(xs, w_ref[di * 3 + dj],
                                    preferred_element_type=jnp.float32)
        y = _act(acc + b_ref[...], act)
        if r_ref is not None:
            y = y + r_ref[h].astype(jnp.float32)
        o_ref[h] = y.astype(o_ref.dtype)
        return carry

    jax.lax.fori_loop(0, H, row, 0)


def _dw_se_s1_kernel(x_ref, w_ref, b_ref, w1_ref, b1_ref, w2_ref, b2_ref,
                     y_ref, gate_ref):
    # Stride-1 3x3 depthwise conv + fused SE: per output row, 9 shifted per-channel MACs
    # (unrolled tap loop), fused bias + SiLU, write the activation AND accumulate the global
    # average pool; after the row loop run the two tiny SE FCs and emit the sigmoid gate.
    H, W, C = y_ref.shape

    def row(h, psum):
        acc = jnp.zeros((W, C), jnp.float32)
        for di in range(3):
            for dj in range(3):
                xs = x_ref[h + di, pl.ds(dj, W), :].astype(jnp.float32)   # (W, C)
                acc = acc + xs * w_ref[di * 3 + dj].astype(jnp.float32)
        y = _act(acc + b_ref[...], "silu")
        y_ref[h] = y.astype(y_ref.dtype)
        return psum + jnp.sum(y, axis=0, keepdims=True)                   # (1, C)

    psum = jax.lax.fori_loop(0, H, row, jnp.zeros((1, C), jnp.float32))
    pooled = psum * (1.0 / float(H * W))
    hid = jnp.dot(pooled.astype(jnp.bfloat16), w1_ref[...],
                  preferred_element_type=jnp.float32) + b1_ref[...]
    hid = hid * jax.nn.sigmoid(hid)                                       # SiLU
    g = jnp.dot(hid.astype(jnp.bfloat16), w2_ref[...],
                preferred_element_type=jnp.float32) + b2_ref[...]
    gate_ref[...] = jax.nn.sigmoid(g).astype(gate_ref.dtype)


def _dw_tap_kernel(p_ref, w_ref, b_ref, o_ref, *, act):
    # im2col depthwise fallback (stride-2 layers): unrolled per-tap MAC, no (tm,9,C) f32 temp.
    taps = p_ref.shape[1]
    acc = jnp.zeros((p_ref.shape[0], p_ref.shape[2]), jnp.float32)
    for t in range(taps):
        acc = acc + p_ref[:, t, :].astype(jnp.float32) * w_ref[t].astype(jnp.float32)
    o_ref[...] = _act(acc + b_ref[...], act).astype(o_ref.dtype)


def _se_pool_kernel(x_ref, w1_ref, b1_ref, w2_ref, b2_ref, s_ref, acc_ref,
                    *, hw_total, t_hw, need_mask):
    # SE gate for the im2col depthwise path: accumulate GAP over HW tiles, then the two FCs.
    h = pl.program_id(0)

    @pl.when(h == 0)
    def _init():
        acc_ref[...] = jnp.zeros_like(acc_ref)

    x = x_ref[...].astype(jnp.float32)                       # (B, t_hw, C)
    if need_mask:
        row = h * t_hw + jax.lax.broadcasted_iota(jnp.int32, (1, t_hw, 1), 1)
        x = jnp.where(row < hw_total, x, 0.0)
    acc_ref[...] += jnp.sum(x, axis=1)                       # (B, C)

    @pl.when(h == pl.num_programs(0) - 1)
    def _fin():
        pooled = acc_ref[...] * (1.0 / float(hw_total))
        hdn = jnp.dot(pooled.astype(jnp.bfloat16), w1_ref[...],
                      preferred_element_type=jnp.float32) + b1_ref[...]
        hdn = hdn * jax.nn.sigmoid(hdn)                      # SiLU
        gate = jnp.dot(hdn.astype(jnp.bfloat16), w2_ref[...],
                       preferred_element_type=jnp.float32) + b2_ref[...]
        s_ref[...] = jax.nn.sigmoid(gate)[:, None, :].astype(s_ref.dtype)


def _se_proj_kernel(*refs, has_res):
    # Fused MBConv tail: (x * SE-gate) @ w_proj + bias (+ residual), per (batch, HW-tile).
    # Gate multiply done in bf16 (feeds the MXU as bf16 anyway).
    if has_res:
        x_ref, g_ref, w_ref, b_ref, r_ref, o_ref = refs
    else:
        x_ref, g_ref, w_ref, b_ref, o_ref = refs
        r_ref = None
    xs = x_ref[0] * g_ref[0].astype(jnp.bfloat16)            # (t_hw, Cexp) bf16
    acc = jnp.dot(xs, w_ref[...], preferred_element_type=jnp.float32) + b_ref[...]
    if r_ref is not None:
        acc = acc + r_ref[0].astype(jnp.float32)
    o_ref[0] = acc.astype(o_ref.dtype)


def _pool_fc_kernel(x_ref, w_ref, b_ref, o_ref, acc_ref, *, hw_total, t_hw, need_mask):
    # Global average pool over HW tiles + classifier Linear(1280, 1).
    # TODO(synk): add a leading parallel axis so both v7x TensorCores share this reduction.
    h = pl.program_id(0)

    @pl.when(h == 0)
    def _init():
        acc_ref[...] = jnp.zeros_like(acc_ref)

    x = x_ref[...].astype(jnp.float32)                       # (B, t_hw, C)
    if need_mask:
        row = h * t_hw + jax.lax.broadcasted_iota(jnp.int32, (1, t_hw, 1), 1)
        x = jnp.where(row < hw_total, x, 0.0)
    acc_ref[...] += jnp.sum(x, axis=1)

    @pl.when(h == pl.num_programs(0) - 1)
    def _fin():
        pooled = acc_ref[...] * (1.0 / float(hw_total))
        out = jnp.dot(pooled.astype(jnp.bfloat16), w_ref[...],
                      preferred_element_type=jnp.float32) + b_ref[...]
        o_ref[...] = out.astype(o_ref.dtype)


# ----------------------------------------------------------------------------- Pallas wrappers

def matmul_bias_act(x2d, w2d, bias, act="none", residual=None, out_dtype=jnp.bfloat16):
    m, k = x2d.shape
    n = w2d.shape[1]
    has_res = residual is not None
    out_b = jnp.dtype(out_dtype).itemsize
    fixed = 2 * k * n * 2 + 8 * n
    per_row = 2 * k * 2 + 2 * n * out_b + n * 4 + (2 * n * 2 if has_res else 0)
    tm = _pick_rows(m, per_row, fixed)
    grid = (pl.cdiv(m, tm),)

    in_specs = [
        pl.BlockSpec((tm, k), lambda i: (i, 0)),
        pl.BlockSpec((k, n), lambda i: (0, 0)),
        pl.BlockSpec((1, n), lambda i: (0, 0)),
    ]
    args = [x2d.astype(jnp.bfloat16), w2d.astype(jnp.bfloat16),
            bias.reshape(1, n).astype(jnp.float32)]
    if has_res:
        in_specs.append(pl.BlockSpec((tm, n), lambda i: (i, 0)))
        args.append(residual.astype(jnp.bfloat16))

    kern = functools.partial(_matmul_bias_kernel, act=act, has_res=has_res)
    return pl.pallas_call(
        kern,
        out_shape=jax.ShapeDtypeStruct((m, n), out_dtype),
        grid=grid,
        in_specs=in_specs,
        out_specs=pl.BlockSpec((tm, n), lambda i: (i, 0)),
        compiler_params=_compiler_params("parallel"),
    )(*args)


def _extract_patches(x, kh, kw, stride, pad):
    # Plain-JAX im2col glue, kept ONLY for the few stride-2 convolutions.
    xp = jnp.pad(x, ((0, 0), (pad, pad), (pad, pad), (0, 0)))
    _, hp, wp, _ = xp.shape
    ho = (hp - kh) // stride + 1
    wo = (wp - kw) // stride + 1
    taps = []
    for i in range(kh):
        for j in range(kw):
            taps.append(xp[:, i:i + stride * ho:stride, j:j + stride * wo:stride, :])
    return jnp.stack(taps, axis=3), ho, wo


def _conv3x3_s1(x, w, bias, act, residual):
    b, h, w_, cin = x.shape
    cout = w.shape[3]
    xp = jnp.pad(x, ((0, 0), (1, 1), (1, 1), (0, 0)))
    hp, wp = h + 2, w_ + 2
    w9 = w.reshape(9, cin, cout)
    has_res = residual is not None

    in_specs = [
        pl.BlockSpec((None, hp, wp, cin), lambda i: (i, 0, 0, 0)),
        pl.BlockSpec((9, cin, cout), lambda i: (0, 0, 0)),
        pl.BlockSpec((1, cout), lambda i: (0, 0)),
    ]
    args = [xp, w9, bias.reshape(1, cout).astype(jnp.float32)]
    if has_res:
        in_specs.append(pl.BlockSpec((None, h, w_, cout), lambda i: (i, 0, 0, 0)))
        args.append(residual.astype(jnp.bfloat16))

    kern = functools.partial(_conv3x3_s1_kernel, act=act, has_res=has_res)
    return pl.pallas_call(
        kern,
        out_shape=jax.ShapeDtypeStruct((b, h, w_, cout), jnp.bfloat16),
        grid=(b,),
        in_specs=in_specs,
        out_specs=pl.BlockSpec((None, h, w_, cout), lambda i: (i, 0, 0, 0)),
        compiler_params=_compiler_params("parallel"),
    )(*args)


def conv2d_bias_act(x, w, stride, pad, bias, act="none", residual=None):
    """Conv + (folded-into-weights) BN + activation (+ residual).  w: (kh, kw, cin, cout)."""
    kh, kw, cin, cout = w.shape
    b, h_in, w_in, _ = x.shape

    if kh == 1 and kw == 1 and stride == 1 and pad == 0:
        ho, wo = h_in, w_in
        res2 = None if residual is None else residual.reshape(b * ho * wo, cout)
        out = matmul_bias_act(x.reshape(b * ho * wo, cin), w.reshape(cin, cout),
                              bias, act, residual=res2)
        return out.reshape(b, ho, wo, cout)

    if kh == 3 and kw == 3 and stride == 1 and pad == 1:
        est = (2 * (h_in + 2) * (w_in + 2) * cin * 2 + 2 * h_in * w_in * cout * 2
               + 2 * 9 * cin * cout * 2
               + (2 * h_in * w_in * cout * 2 if residual is not None else 0))
        if est <= _TILE_BUDGET:
            return _conv3x3_s1(x, w, bias, act, residual)
        # TODO(synk): halo'd row-tile variant for images too large for one VMEM slab.

    # Fallback (stride-2 convs / oversized stride-1 images): im2col + fused matmul.
    patches, ho, wo = _extract_patches(x, kh, kw, stride, pad)
    p2 = patches.reshape(b * ho * wo, kh * kw * cin)
    res2 = None if residual is None else residual.reshape(b * ho * wo, cout)
    out = matmul_bias_act(p2, w.reshape(kh * kw * cin, cout), bias, act, residual=res2)
    return out.reshape(b, ho, wo, cout)


def depthwise_im2col(x, w_dw, k, stride, pad, bias):
    # Stride-2 depthwise fallback.  w_dw: (k*k, C), scale-folded.
    b, _, _, c = x.shape
    patches, ho, wo = _extract_patches(x, k, k, stride, pad)
    m = b * ho * wo
    taps = k * k
    p2 = patches.reshape(m, taps, c)
    per_row = 2 * taps * c * 2 + 2 * c * 2 + c * 4
    fixed = 2 * taps * c * 2 + 8 * c
    tm = _pick_rows(m, per_row, fixed)
    grid = (pl.cdiv(m, tm),)

    kern = functools.partial(_dw_tap_kernel, act="silu")
    out = pl.pallas_call(
        kern,
        out_shape=jax.ShapeDtypeStruct((m, c), jnp.bfloat16),
        grid=grid,
        in_specs=[
            pl.BlockSpec((tm, taps, c), lambda i: (i, 0, 0)),
            pl.BlockSpec((taps, c), lambda i: (0, 0)),
            pl.BlockSpec((1, c), lambda i: (0, 0)),
        ],
        out_specs=pl.BlockSpec((tm, c), lambda i: (i, 0)),
        compiler_params=_compiler_params("parallel"),
    )(p2, w_dw, bias.reshape(1, c).astype(jnp.float32))
    return out.reshape(b, ho, wo, c)


def se_gate(x_bhwc, w1, b1, w2, b2):
    # SE gate for the im2col-depthwise path: s = sigmoid(W2 silu(W1 GAP(x) + b1) + b2).
    b, h, w_, c = x_bhwc.shape
    hw = h * w_
    csq = w1.shape[1]
    x3 = x_bhwc.reshape(b, hw, c)
    per_row = 2 * b * c * 2 + b * c * 4
    fixed = 4 * (c * csq * 2) + b * c * 4
    t_hw = _pick_rows(hw, per_row, fixed)
    grid = (pl.cdiv(hw, t_hw),)
    need_mask = (hw % t_hw) != 0

    kern = functools.partial(_se_pool_kernel, hw_total=hw, t_hw=t_hw, need_mask=need_mask)
    return pl.pallas_call(
        kern,
        out_shape=jax.ShapeDtypeStruct((b, 1, c), jnp.float32),
        grid=grid,
        in_specs=[
            pl.BlockSpec((b, t_hw, c), lambda i: (0, i, 0)),
            pl.BlockSpec((c, csq), lambda i: (0, 0)),
            pl.BlockSpec((1, csq), lambda i: (0, 0)),
            pl.BlockSpec((csq, c), lambda i: (0, 0)),
            pl.BlockSpec((1, c), lambda i: (0, 0)),
        ],
        out_specs=pl.BlockSpec((b, 1, c), lambda i: (0, 0, 0)),
        scratch_shapes=[pltpu.VMEM((b, c), jnp.float32)],
        compiler_params=_compiler_params("arbitrary"),
    )(x3.astype(jnp.bfloat16), w1, b1.reshape(1, csq).astype(jnp.float32),
      w2, b2.reshape(1, c).astype(jnp.float32))


def depthwise_se_fused(x, w_dw, b_dw, se_w1, se_b1, se_w2, se_b2):
    """Stride-1 depthwise 3x3 + fused SE pool/FCs.  Returns (activation, gate)."""
    b, h, w_, c = x.shape
    csq = se_w1.shape[1]
    est = (2 * (h + 2) * (w_ + 2) * c * 2 + 2 * h * w_ * c * 2
           + 9 * c * 4 + 4 * c * csq * 2 + 8 * c * 4)
    if est > _TILE_BUDGET:
        # TODO(synk): halo'd row-tile variant for very large expanded images.
        y = depthwise_im2col(x, w_dw, 3, 1, 1, b_dw)
        return y, se_gate(y, se_w1, se_b1, se_w2, se_b2)

    xp = jnp.pad(x, ((0, 0), (1, 1), (1, 1), (0, 0)))
    hp, wp = h + 2, w_ + 2
    y, gate = pl.pallas_call(
        _dw_se_s1_kernel,
        out_shape=(jax.ShapeDtypeStruct((b, h, w_, c), jnp.bfloat16),
                   jax.ShapeDtypeStruct((b, 1, c), jnp.float32)),
        grid=(b,),
        in_specs=[
            pl.BlockSpec((None, hp, wp, c), lambda i: (i, 0, 0, 0)),
            pl.BlockSpec((9, c), lambda i: (0, 0)),
            pl.BlockSpec((1, c), lambda i: (0, 0)),
            pl.BlockSpec((c, csq), lambda i: (0, 0)),
            pl.BlockSpec((1, csq), lambda i: (0, 0)),
            pl.BlockSpec((csq, c), lambda i: (0, 0)),
            pl.BlockSpec((1, c), lambda i: (0, 0)),
        ],
        out_specs=(pl.BlockSpec((None, h, w_, c), lambda i: (i, 0, 0, 0)),
                   pl.BlockSpec((None, 1, c), lambda i: (i, 0, 0))),
        compiler_params=_compiler_params("parallel"),
    )(xp, w_dw, b_dw.reshape(1, c).astype(jnp.float32),
      se_w1, se_b1.reshape(1, csq).astype(jnp.float32),
      se_w2, se_b2.reshape(1, c).astype(jnp.float32))
    return y, gate


def se_scale_proj(x_bhwc, gate, w2d, bias, residual=None):
    # Fused MBConv tail: (x * gate) @ w_proj + bias (+ residual).  w2d: (Cexp, Cout).
    b, h, w_, cexp = x_bhwc.shape
    cout = w2d.shape[1]
    hw = h * w_
    x3 = x_bhwc.reshape(b, hw, cexp)
    has_res = residual is not None
    fixed = 2 * cexp * cout * 2 + 8 * cout + 2 * cexp * 4
    per_row = 2 * cexp * 2 + 2 * cout * 2 + (2 * cout * 2 if has_res else 0)
    t_hw = _pick_rows(hw, per_row, fixed)
    grid = (b, pl.cdiv(hw, t_hw))

    in_specs = [
        pl.BlockSpec((1, t_hw, cexp), lambda bi, hi: (bi, hi, 0)),
        pl.BlockSpec((1, 1, cexp), lambda bi, hi: (bi, 0, 0)),
        pl.BlockSpec((cexp, cout), lambda bi, hi: (0, 0)),
        pl.BlockSpec((1, cout), lambda bi, hi: (0, 0)),
    ]
    args = [x3, gate, w2d, bias.reshape(1, cout).astype(jnp.float32)]
    if has_res:
        in_specs.append(pl.BlockSpec((1, t_hw, cout), lambda bi, hi: (bi, hi, 0)))
        args.append(residual.reshape(b, hw, cout).astype(jnp.bfloat16))

    kern = functools.partial(_se_proj_kernel, has_res=has_res)
    out = pl.pallas_call(
        kern,
        out_shape=jax.ShapeDtypeStruct((b, hw, cout), jnp.bfloat16),
        grid=grid,
        in_specs=in_specs,
        out_specs=pl.BlockSpec((1, t_hw, cout), lambda bi, hi: (bi, hi, 0)),
        compiler_params=_compiler_params("parallel", "parallel"),
    )(*args)
    return out.reshape(b, h, w_, cout)


def pool_classifier(x_bhwc, w, bias):
    # avgpool + flatten + (Dropout: identity in eval) + classifier Linear(1280, 1)
    b, h, w_, c = x_bhwc.shape
    hw = h * w_
    n = w.shape[1]
    x3 = x_bhwc.reshape(b, hw, c)
    per_row = 2 * b * c * 2 + b * c * 4
    fixed = 2 * c * n * 2 + b * c * 4
    t_hw = _pick_rows(hw, per_row, fixed)
    grid = (pl.cdiv(hw, t_hw),)
    need_mask = (hw % t_hw) != 0

    kern = functools.partial(_pool_fc_kernel, hw_total=hw, t_hw=t_hw, need_mask=need_mask)
    return pl.pallas_call(
        kern,
        out_shape=jax.ShapeDtypeStruct((b, n), jnp.float32),
        grid=grid,
        in_specs=[
            pl.BlockSpec((b, t_hw, c), lambda i: (0, i, 0)),
            pl.BlockSpec((c, n), lambda i: (0, 0)),
            pl.BlockSpec((1, n), lambda i: (0, 0)),
        ],
        out_specs=pl.BlockSpec((b, n), lambda i: (0, 0)),
        scratch_shapes=[pltpu.VMEM((b, c), jnp.float32)],
        compiler_params=_compiler_params("arbitrary"),
    )(x3.astype(jnp.bfloat16), w, bias.reshape(1, n).astype(jnp.float32))


# ----------------------------------------------------------------------------- parameters

def _conv_w(key, kh, kw, cin, cout):
    fan = kh * kw * cin
    return jax.random.normal(key, (kh, kw, cin, cout), jnp.float32) / math.sqrt(fan)


def _dw_w(key, k, c):
    return jax.random.normal(key, (k * k, c), jnp.float32) / float(k * k)


def _linear(key, cin, cout):
    kw_, kb = jax.random.split(key)
    w = (jax.random.normal(kw_, (cin, cout), jnp.float32) / math.sqrt(cin)).astype(jnp.bfloat16)
    b = jax.random.normal(kb, (cout,), jnp.float32) * 0.01
    return w, b


# default-initialized eval-mode BatchNorm2d(eps=1e-3): gamma=1, beta=0, mean=0, var=1
_BN_SCALE = 1.0 / math.sqrt(1.0 + BN_EPS)


def _fold(w):
    """Fold the (constant, default-init) BN scale into the conv weight; keep bf16."""
    return (w * _BN_SCALE).astype(jnp.bfloat16)


def init_params(key, layers_override=None):
    counter = [0]

    def nk():
        counter[0] += 1
        return jax.random.fold_in(key, counter[0])

    # replaced features[0]: bare conv, no BN/activation
    params = {"stem_w": _conv_w(nk(), 3, 3, 4, 24).astype(jnp.bfloat16),
              "stem_b": jnp.zeros((24,), jnp.float32)}

    blocks = []
    for si, (btype, exp, k, stride, cin, cout, layers) in enumerate(EFFNET_V2_L_STAGES):
        if layers_override is not None:
            layers = min(layers, int(layers_override[si]))
        for li in range(layers):
            bin_c = cin if li == 0 else cout
            bstride = stride if li == 0 else 1
            cexp = bin_c * exp
            blk = {"type": btype, "k": k, "stride": bstride, "in": bin_c, "out": cout, "exp": exp}
            if btype == "fused":
                if exp == 1:
                    blk["w_main"] = _fold(_conv_w(nk(), k, k, bin_c, cout))
                    blk["b_main"] = jnp.zeros((cout,), jnp.float32)
                else:
                    blk["w_exp"] = _fold(_conv_w(nk(), k, k, bin_c, cexp))
                    blk["b_exp"] = jnp.zeros((cexp,), jnp.float32)
                    blk["w_proj"] = _fold(_conv_w(nk(), 1, 1, cexp, cout))
                    blk["b_proj"] = jnp.zeros((cout,), jnp.float32)
            else:  # MBConv
                blk["w_exp"] = _fold(_conv_w(nk(), 1, 1, bin_c, cexp))
                blk["b_exp"] = jnp.zeros((cexp,), jnp.float32)
                blk["w_dw"] = _fold(_dw_w(nk(), k, cexp))
                blk["b_dw"] = jnp.zeros((cexp,), jnp.float32)
                csq = max(1, bin_c // 4)
                blk["se_w1"], blk["se_b1"] = _linear(nk(), cexp, csq)
                blk["se_w2"], blk["se_b2"] = _linear(nk(), csq, cexp)
                # projection weight stored 2-D (Cexp, Cout) -- fixes the previous reshape crash
                blk["w_proj"] = _fold(_conv_w(nk(), 1, 1, cexp, cout)).reshape(cexp, cout)
                blk["b_proj"] = jnp.zeros((cout,), jnp.float32)
            blocks.append(blk)
    params["blocks"] = blocks

    head_in = EFFNET_V2_L_STAGES[-1][5]
    params["head_w"] = _fold(_conv_w(nk(), 1, 1, head_in, LAST_CHANNEL))
    params["head_b"] = jnp.zeros((LAST_CHANNEL,), jnp.float32)
    params["cls_w"], params["cls_b"] = _linear(nk(), LAST_CHANNEL, 1)   # classifier[1]
    return params


# ----------------------------------------------------------------------------- forward

def _run_block(x, blk):
    k, stride = blk["k"], blk["stride"]
    use_res = (stride == 1 and blk["in"] == blk["out"])
    res = x if use_res else None
    if blk["type"] == "fused":
        if blk["exp"] == 1:
            return conv2d_bias_act(x, blk["w_main"], stride, k // 2, blk["b_main"],
                                   act="silu", residual=res)
        y = conv2d_bias_act(x, blk["w_exp"], stride, k // 2, blk["b_exp"], act="silu")
        return conv2d_bias_act(y, blk["w_proj"], 1, 0, blk["b_proj"], act="none", residual=res)
    # MBConv: expand 1x1 -> depthwise kxk (+ fused SE) -> (gate * x) @ proj + bias (+ residual)
    y = conv2d_bias_act(x, blk["w_exp"], 1, 0, blk["b_exp"], act="silu")
    if stride == 1 and k == 3:
        y, gate = depthwise_se_fused(y, blk["w_dw"], blk["b_dw"],
                                     blk["se_w1"], blk["se_b1"], blk["se_w2"], blk["se_b2"])
    else:
        y = depthwise_im2col(y, blk["w_dw"], k, stride, k // 2, blk["b_dw"])
        gate = se_gate(y, blk["se_w1"], blk["se_b1"], blk["se_w2"], blk["se_b2"])
    return se_scale_proj(y, gate, blk["w_proj"], blk["b_proj"], residual=res)


def efficientnet_v2_l_forward(params, x_nchw):
    # layout: NCHW (PyTorch) -> NHWC once; all Pallas kernels are channels-last, bf16 activations.
    x = jnp.transpose(x_nchw, (0, 2, 3, 1)).astype(jnp.bfloat16)

    # replaced features[0]: bare Conv2d(4->24, 3x3, s2, p1, bias=False), no BN / activation
    x = conv2d_bias_act(x, params["stem_w"], 2, 1, params["stem_b"], act="none")

    for blk in params["blocks"]:
        x = _run_block(x, blk)

    # head conv 1x1 -> 1280 + BN + SiLU
    x = conv2d_bias_act(x, params["head_w"], 1, 0, params["head_b"], act="silu")

    # avgpool + flatten + Dropout(identity in eval) + Linear(1280, 1)
    return pool_classifier(x, params["cls_w"], params["cls_b"])       # (B, 1) f32


# ----------------------------------------------------------------------------- demo

if __name__ == "__main__":
    key = jax.random.PRNGKey(0)
    kx, kp = jax.random.split(key)

    B = 2
    x = jax.random.normal(kx, (B, 4, 16, 16), jnp.float32)            # NCHW, 4-channel images

    # TODO(synk): demo uses a reduced per-stage depth (true channel widths; residual, fused,
    # both depthwise paths and SE all exercised) to keep compile time small; pass
    # layers_override=None for the full (4,7,7,10,19,25,7)-deep backbone.
    params = init_params(kp, layers_override=(2, 1, 1, 2, 1, 1, 1))

    pred = efficientnet_v2_l_forward(params, x)
    pred = jax.block_until_ready(pred)
    assert pred.shape == (B, 1) and pred.dtype == jnp.float32

    print("KERNEL_OK")
</pallas_src>

<mosaic_0001>
module attributes {stable_mosaic.version = 11 : i64} {
  func.func @_matmul_bias_kernel(%arg0: i32, %arg1: memref<128x36xbf16, #tpu.memory_space<vmem>>, %arg2: memref<36x24xbf16, #tpu.memory_space<vmem>>, %arg3: memref<1x24xf32, #tpu.memory_space<vmem>>, %arg4: memref<128x24xbf16, #tpu.memory_space<vmem>>) attributes {dimension_semantics = [#tpu.dimension_semantics<parallel>], iteration_bounds = array<i64: 1>, scalar_prefetch = 0 : i64, scratch_operands = 0 : i64, tpu.core_type = #tpu.core_type<tc>, window_params = [{transform_indices = @transform_0, window_bounds = array<i64: 128, 36>}, {pipeline_mode = #tpu.pipeline_mode<synchronous>, transform_indices = @transform_1, window_bounds = array<i64: 36, 24>}, {pipeline_mode = #tpu.pipeline_mode<synchronous>, transform_indices = @transform_2, window_bounds = array<i64: 1, 24>}, {transform_indices = @transform_3, window_bounds = array<i64: 128, 24>}]} {
    %c0 = arith.constant 0 : index
    %c0_0 = arith.constant 0 : index
    %0 = vector.load %arg1[%c0, %c0_0] : memref<128x36xbf16, #tpu.memory_space<vmem>>, vector<128x36xbf16>
    %c0_1 = arith.constant 0 : index
    %c0_2 = arith.constant 0 : index
    %1 = vector.load %arg2[%c0_1, %c0_2] : memref<36x24xbf16, #tpu.memory_space<vmem>>, vector<36x24xbf16>
    %cst = arith.constant dense<0.000000e+00> : vector<128x24xf32>
    %2 = tpu.matmul %0, %1, %cst {dimension_numbers = #tpu.dot_dimension_numbers<[1], [0], [0], [1], [0, 0, 1, 1], [], []>} : vector<128x36xbf16>, vector<36x24xbf16>, vector<128x24xf32> -> vector<128x24xf32>
    %c0_3 = arith.constant 0 : index
    %c0_4 = arith.constant 0 : index
    %3 = vector.load %arg3[%c0_3, %c0_4] : memref<1x24xf32, #tpu.memory_space<vmem>>, vector<1x24xf32>
    %4 = vector.broadcast %3 : vector<1x24xf32> to vector<128x24xf32>
    %5 = arith.addf %2, %4 : vector<128x24xf32>
    %6 = arith.truncf %5 : vector<128x24xf32> to vector<128x24xbf16>
    %c0_5 = arith.constant 0 : index
    %c0_6 = arith.constant 0 : index
    %7 = vector.load %arg4[%c0_5, %c0_6] : memref<128x24xbf16, #tpu.memory_space<vmem>>, vector<128x24xbf16>
    tpu.vector_store %arg4[%c0_5, %c0_6], %6 {strides = array<i32>} : memref<128x24xbf16, #tpu.memory_space<vmem>>, vector<128x24xbf16>,
    return
  }
  func.func @transform_0(%arg0: i32) -> (i32, i32) {
    %c0_i32 = arith.constant 0 : i32
    %c0_i32_0 = arith.constant 0 : i32
    return %arg0, %c0_i32 : i32, i32
  }
  func.func @transform_1(%arg0: i32) -> (i32, i32) {
    %c0_i32 = arith.constant 0 : i32
    %c0_i32_0 = arith.constant 0 : i32
    %c0_i32_1 = arith.constant 0 : i32
    return %c0_i32, %c0_i32_0 : i32, i32
  }
  func.func @transform_2(%arg0: i32) -> (i32, i32) {
    %c0_i32 = arith.constant 0 : i32
    %c0_i32_0 = arith.constant 0 : i32
    %c0_i32_1 = arith.constant 0 : i32
    return %c0_i32, %c0_i32_0 : i32, i32
  }
  func.func @transform_3(%arg0: i32) -> (i32, i32) {
    %c0_i32 = arith.constant 0 : i32
    %c0_i32_0 = arith.constant 0 : i32
    return %arg0, %c0_i32 : i32, i32
  }
}

</mosaic_0001>

<llo_original>
// kernel: tpu_custom_call.1
$region0: #{tpu_custom_call.1}
  #allocation0 [shape = 'u32[]', space=smem, size = 0x4, offset = 0x4, fixed_abs, tag = 'smem constant byte address 0x4 - core index']
  #allocation1 [shape = 'u32[72,128]{1,0:T(1,128)}', space=vmem, size = 0x9000, scoped, tag = 'internal scratch']
  %s0 = inlined_call_operand.vmem [shape: bf16[128,36], index: 0, kind: input, shape index: {}]
  %s1 = inlined_call_operand.vmem [shape: bf16[36,24], index: 1, kind: input, shape index: {}]
  %s2 = inlined_call_operand.vmem [shape: f32[1,24], index: 2, kind: input, shape index: {}]
  %s3 = inlined_call_operand.vmem [shape: bf16[128,24], index: 3, kind: output, shape index: {}]
  %s4 = sld [smem:[#allocation0]]
  $region22: #{tpu_custom_call.1} parent=0
    _
  %s6 = ssub.s32 1, %s4
  %s7 = scalar_select 0, %s6, %s4
  // Predicated region
  $region2: #{tpu_custom_call.1} parent=0 // pred_check
    _
  $region3: #{tpu_custom_call.1} parent=0 // pred_check_branch
    %9 = sbr.rel (0) target = $region5
  $region4: #{tpu_custom_call.1} parent=0 // pred_region
    _
  $region5: #{tpu_custom_call.1} parent=0 // pred_fallthru
    _
  // Predicated region
  $region6: #{tpu_custom_call.1} parent=0 // pred_check
    _
  $region7: #{tpu_custom_call.1} parent=0 // pred_check_branch
    %11 = sbr.rel (0) target = $region9
  $region8: #{tpu_custom_call.1} parent=0 // pred_region
    _
  $region9: #{tpu_custom_call.1} parent=0 // pred_fallthru
    _
  // Predicated region
  $region10: #{tpu_custom_call.1} parent=0 // pred_check
    _
  $region11: #{tpu_custom_call.1} parent=0 // pred_check_branch
    %13 = sbr.rel (0) target = $region13
  $region12: #{tpu_custom_call.1} parent=0 // pred_region
    _
  $region13: #{tpu_custom_call.1} parent=0 // pred_fallthru
    _
  %v15 = vld [vmem:[%s0] sm:$0xf]
  %v16 = vld [vmem:[%s0 + $0x4] sm:$0xf]
  %v17 = vld [vmem:[%s0 + $0x8] sm:$0xf]
  %v18 = vld [vmem:[%s0 + $0xc] sm:$0xf]
  %v19 = vld [vmem:[%s0 + $0x10] sm:$0xf]
  %v20 = vld [vmem:[%s0 + $0x14] sm:$0xf]
  %v21 = vld [vmem:[%s0 + $0x18] sm:$0xf]
  %v22 = vld [vmem:[%s0 + $0x1c] sm:$0xf]
  %v23 = vld [vmem:[%s0 + $0x20] sm:$0xf]
  %v24 = vld [vmem:[%s0 + $0x24] sm:$0xf]
  %v25 = vld [vmem:[%s0 + $0x28] sm:$0xf]
  %v26 = vld [vmem:[%s0 + $0x2c] sm:$0xf]
  %v27 = vld [vmem:[%s0 + $0x30] sm:$0xf]
  %v28 = vld [vmem:[%s0 + $0x34] sm:$0xf]
  %v29 = vld [vmem:[%s0 + $0x38] sm:$0xf]
  %v30 = vld [vmem:[%s0 + $0x3c] sm:$0xf]
  %v31 = vld [vmem:[%s1] sm:$0xf]
  %v32 = vld [vmem:[%s1 + $0x4] sm:$0xf]
  %v33 = vld [vmem:[%s1 + $0x8] sm:$0xf]
  %v34 = vld [vmem:[%s1 + $0xc] sm:$0xf]
  %v35 = vld [vmem:[%s1 + $0x10] sm:$0x3]
  %v36 = vld [vmem:[%s2] sm:$0x1]
  %v38 = vperm.slane %v36, 0
  %v56 = vunpack.c.l.b16 %v15
  %v57 = vunpack.c.l.b16 %v16
  %v58 = vunpack.c.l.b16 %v17
  %v59 = vunpack.c.l.b16 %v18
  %v60 = vunpack.c.l.b16 %v19
  %v61 = vunpack.c.l.b16 %v20
  %v62 = vunpack.c.l.b16 %v21
  %v63 = vunpack.c.l.b16 %v22
  %v64 = vunpack.c.l.b16 %v23
  %v65 = vunpack.c.l.b16 %v24
  %v66 = vunpack.c.l.b16 %v25
  %v67 = vunpack.c.l.b16 %v26
  %v68 = vunpack.c.l.b16 %v27
  %v69 = vunpack.c.l.b16 %v28
  %v70 = vunpack.c.l.b16 %v29
  %v71 = vunpack.c.l.b16 %v30
  %v72 = vpack.c.b16 %v57, %v56
  %v73 = vpack.c.b16 %v59, %v58
  %v74 = vpack.c.b16 %v61, %v60
  %v75 = vpack.c.b16 %v63, %v62
  %v76 = vpack.c.b16 %v65, %v64
  %v77 = vpack.c.b16 %v67, %v66
  %v78 = vpack.c.b16 %v69, %v68
  %v79 = vpack.c.b16 %v71, %v70
  %v85 = vunpack.c.l.b16 %v31
  %v86 = vunpack.c.l.b16 %v32
  %v87 = vunpack.c.l.b16 %v33
  %v88 = vunpack.c.l.b16 %v34
  %v89 = vunpack.c.l.b16 %v35
  %v90 = vpack.c.b16 %v86, %v85
  %v91 = vpack.c.b16 %v88, %v87
  %v92 = vpack.c.b16 %v89, %v89
  %vm95 = vcmask 293888
  %v97 = vsel %vm95, %v72, 0
  %v100 = vsel %vm95, %v73, 0
  %v103 = vsel %vm95, %v74, 0
  %v106 = vsel %vm95, %v75, 0
  %v109 = vsel %vm95, %v76, 0
  %v112 = vsel %vm95, %v77, 0
  %v115 = vsel %vm95, %v78, 0
  %v118 = vsel %vm95, %v79, 0
  %vm120 = vcmask 1041408
  %v122 = vsel %vm120, %v92, 0
  %124 = vmatpush.bf16.msra.mxu0 0
  %125 = vmatpush.bf16.msra.mxu0 0
  %126 = vmatpush.bf16.msra.mxu0 0
  %127 = vmatpush.bf16.msra.mxu0 0
  %128 = vmatpush.bf16.msra.mxu0 0
  %129 = vmatpush.bf16.msra.mxu0 %v122
  %130 = vmatpush.bf16.msra.mxu0 %v91
  %131 = vmatpush.bf16.msra.mxu0 %v90
  %132 = vmatmul.bf16.gmra.mxu0 %v97
  %v133 = vpop.f32.mrf.mxu0
  %v134 = vadd.f32 %v38, %v133
  %v135 = vpop.f32.mrf.mxu0
  %v136 = vadd.f32 %v38, %v135
  %137 = vmatmul.bf16.gmra.mxu0 %v100
  %v138 = vpop.f32.mrf.mxu0
  %v139 = vadd.f32 %v38, %v138
  %v140 = vpop.f32.mrf.mxu0
  %v141 = vadd.f32 %v38, %v140
  %142 = vmatmul.bf16.gmra.mxu0 %v103
  %v143 = vpop.f32.mrf.mxu0
  %v144 = vadd.f32 %v38, %v143
  %v145 = vpop.f32.mrf.mxu0
  %v146 = vadd.f32 %v38, %v145
  %147 = vmatmul.bf16.gmra.mxu0 %v106
  %v148 = vpop.f32.mrf.mxu0
  %v149 = vadd.f32 %v38, %v148
  %v150 = vpop.f32.mrf.mxu0
  %v151 = vadd.f32 %v38, %v150
  %152 = vmatmul.bf16.gmra.mxu0 %v109
  %v153 = vpop.f32.mrf.mxu0
  %v154 = vadd.f32 %v38, %v153
  %v155 = vpop.f32.mrf.mxu0
  %v156 = vadd.f32 %v38, %v155
  %157 = vmatmul.bf16.gmra.mxu0 %v112
  %v158 = vpop.f32.mrf.mxu0
  %v159 = vadd.f32 %v38, %v158
  %v160 = vpop.f32.mrf.mxu0
  %v161 = vadd.f32 %v38, %v160
  %162 = vmatmul.bf16.gmra.mxu0 %v115
  %v163 = vpop.f32.mrf.mxu0
  %v164 = vadd.f32 %v38, %v163
  %v165 = vpop.f32.mrf.mxu0
  %v166 = vadd.f32 %v38, %v165
  %167 = vmatmul.bf16.gmra.mxu0 %v118
  %v168 = vpop.f32.mrf.mxu0
  %v169 = vadd.f32 %v38, %v168
  %v170 = vpop.f32.mrf.mxu0
  %v171 = vadd.f32 %v38, %v170
  %172 = vdwg.mxu0
  %v173 = vpack.c.bf16 %v134, %v134
  %v174 = vpack.c.bf16 %v136, %v136
  %v175 = vpack.c.bf16 %v139, %v139
  %v176 = vpack.c.bf16 %v141, %v141
  %v177 = vpack.c.bf16 %v144, %v144
  %v178 = vpack.c.bf16 %v146, %v146
  %v179 = vpack.c.bf16 %v149, %v149
  %v180 = vpack.c.bf16 %v151, %v151
  %v181 = vpack.c.bf16 %v154, %v154
  %v182 = vpack.c.bf16 %v156, %v156
  %v183 = vpack.c.bf16 %v159, %v159
  %v184 = vpack.c.bf16 %v161, %v161
  %v185 = vpack.c.bf16 %v164, %v164
  %v186 = vpack.c.bf16 %v166, %v166
  %v187 = vpack.c.bf16 %v169, %v169
  %v188 = vpack.c.bf16 %v171, %v171
  %vm189 = vcmask 191488
  %190 = vst.msk [vmem:[%s3] sm:$0xf] %vm189, %v173
  %191 = vst.msk [vmem:[%s3 + $0x4] sm:$0xf] %vm189, %v174
  %192 = vst.msk [vmem:[%s3 + $0x8] sm:$0xf] %vm189, %v175
  %193 = vst.msk [vmem:[%s3 + $0xc] sm:$0xf] %vm189, %v176
  %194 = vst.msk [vmem:[%s3 + $0x10] sm:$0xf] %vm189, %v177
  %195 = vst.msk [vmem:[%s3 + $0x14] sm:$0xf] %vm189, %v178
  %196 = vst.msk [vmem:[%s3 + $0x18] sm:$0xf] %vm189, %v179
  %197 = vst.msk [vmem:[%s3 + $0x1c] sm:$0xf] %vm189, %v180
  %198 = vst.msk [vmem:[%s3 + $0x20] sm:$0xf] %vm189, %v181
  %199 = vst.msk [vmem:[%s3 + $0x24] sm:$0xf] %vm189, %v182
  %200 = vst.msk [vmem:[%s3 + $0x28] sm:$0xf] %vm189, %v183
  %201 = vst.msk [vmem:[%s3 + $0x2c] sm:$0xf] %vm189, %v184
  %202 = vst.msk [vmem:[%s3 + $0x30] sm:$0xf] %vm189, %v185
  %203 = vst.msk [vmem:[%s3 + $0x34] sm:$0xf] %vm189, %v186
  %204 = vst.msk [vmem:[%s3 + $0x38] sm:$0xf] %vm189, %v187
  %205 = vst.msk [vmem:[%s3 + $0x3c] sm:$0xf] %vm189, %v188
  // Predicated region
  $region14: #{tpu_custom_call.1} parent=0 // pred_check
    _
  $region15: #{tpu_custom_call.1} parent=0 // pred_check_branch
    %207 = sbr.rel (0) target = $region17
  $region16: #{tpu_custom_call.1} parent=0 // pred_region
    _
  $region17: #{tpu_custom_call.1} parent=0 // pred_fallthru
    _
  // Predicated region
  $region18: #{tpu_custom_call.1} parent=0 // pred_check
    _
  $region19: #{tpu_custom_call.1} parent=0 // pred_check_branch
    %209 = sbr.rel (0) target = $region21
  $region20: #{tpu_custom_call.1} parent=0 // pred_region
    _
  $region21: #{tpu_custom_call.1} parent=0 // pred_fallthru
    _

</llo_original>
